<compile_context>
chip_gen: v5e
topology: v5e:2x2
jax: 0.10.0
libtpu: 0.0.40
codegen_flags: <defaults>
</compile_context>

<pallas_src>
import functools

import jax
import jax.numpy as jnp
from jax.experimental import pallas as pl
from jax.experimental.pallas import tpu as pltpu


def _round_up(a: int, b: int) -> int:
    return (a + b - 1) // b * b


def _dpfp_kernel(nu, x_ref, o_ref, zz_ref):
    """x_ref: (tm, D); o_ref: (tm, 2*D*nu); zz_ref: (tm, 4*D) f32 scratch."""
    d = x_ref.shape[-1]
    n = 2 * d
    x = x_ref[...].astype(jnp.float32)
    r = jnp.maximum(x, 0.0)

    # z = [relu(x), -relu(x)]  (kept in registers)
    z = jnp.concatenate([r, -r], axis=-1)                  # (tm, n)
    # zz = [z, z] so that torch.roll(z, j, -1) == zz[:, n-j : 2n-j] for j>=1.
    zz_ref[...] = jnp.concatenate([z, z], axis=-1)         # single full store

    for j in range(1, nu + 1):                              # static unroll
        zr = zz_ref[:, n - j:2 * n - j]                     # roll(z, j)
        o_ref[:, (j - 1) * n:j * n] = (z * zr).astype(o_ref.dtype)


def dpfp_feature_map(x: jax.Array, nu: int = 4, *,
                     target_block_bytes: int = 2 << 20,
                     max_row_tile: int = 1024) -> jax.Array:
    """DPFP feature map; output last dim is 2 * head_dim * nu."""
    orig_shape = x.shape
    d = int(orig_shape[-1])
    n = 2 * d
    out_w = n * nu

    x2d = x.reshape(-1, d)
    m = int(x2d.shape[0])
    itemsize = int(jnp.dtype(x2d.dtype).itemsize)

    # --- row-tile selection: ~target_block_bytes output blocks, tm % 16 == 0
    tm = target_block_bytes // max(1, out_w * itemsize)
    tm = max(16, min(max_row_tile, int(tm)))
    tm = (tm // 16) * 16
    if m > 32:
        # keep at least 2 grid steps so the pipeline overlaps DMA with compute
        # and the parallel axis can be split across TensorCores.
        half = (_round_up(m, 32) // 2 // 16) * 16
        tm = max(16, min(tm, half))
    tm = min(tm, _round_up(m, 16))

    m_pad = _round_up(m, tm)
    if m_pad != m:
        x2d = jnp.pad(x2d, ((0, m_pad - m), (0, 0)))
    grid = (m_pad // tm,)

    # VMEM budget: double-buffered in/out blocks + f32 scratch, capped for v7x.
    block_bytes = tm * (d + out_w) * itemsize + tm * 2 * n * 4
    vmem_limit = int(min(32 * 2 ** 20, max(8 * 2 ** 20, 4 * block_bytes)))

    cost = pl.CostEstimate(
        flops=int(m_pad * (out_w + 2 * d)),
        transcendentals=0,
        bytes_accessed=int(m_pad * (d + out_w) * itemsize),
    )

    out2d = pl.pallas_call(
        functools.partial(_dpfp_kernel, nu),
        out_shape=jax.ShapeDtypeStruct((m_pad, out_w), x2d.dtype),
        grid_spec=pltpu.PrefetchScalarGridSpec(
            num_scalar_prefetch=0,
            grid=grid,
            in_specs=[pl.BlockSpec((tm, d), lambda i: (i, 0))],
            out_specs=pl.BlockSpec((tm, out_w), lambda i: (i, 0)),
            scratch_shapes=[pltpu.VMEM((tm, 2 * n), jnp.float32)],
        ),
        compiler_params=pltpu.CompilerParams(
            dimension_semantics=("parallel",),
            vmem_limit_bytes=vmem_limit,
        ),
        cost_estimate=cost,
    )(x2d)

    if m_pad != m:
        out2d = out2d[:m]
    return out2d.reshape(orig_shape[:-1] + (out_w,))


def _reference(x: jax.Array, nu: int = 4) -> jax.Array:
    """Pure-JAX mirror of the PyTorch forward."""
    r = jnp.maximum(x, 0.0)
    z = jnp.concatenate([r, -r], axis=-1)
    z_rolled = jnp.concatenate(
        [jnp.roll(z, j, axis=-1) for j in range(1, nu + 1)], axis=-1)
    z_repeat = jnp.concatenate([z] * nu, axis=-1)
    return z_repeat * z_rolled


if __name__ == "__main__":
    key = jax.random.PRNGKey(0)
    # (batch, heads, seq, head_dim) as used on q/k in linear-attention layers.
    x = jax.random.normal(key, (2, 2, 16, 64), dtype=jnp.float32)
    nu = 4

    out = dpfp_feature_map(x, nu=nu)
    out = jax.block_until_ready(out)

    ref = _reference(x, nu=nu)
    assert out.shape == ref.shape, (out.shape, ref.shape)
    assert out.dtype == x.dtype
    assert jnp.allclose(out, ref, atol=1e-5, rtol=1e-5)

    print("KERNEL_OK")
</pallas_src>

<mosaic_0001>
module attributes {stable_mosaic.version = 11 : i64} {
  func.func @_dpfp_kernel(%arg0: i32, %arg1: memref<32x64xf32, #tpu.memory_space<vmem>>, %arg2: memref<32x512xf32, #tpu.memory_space<vmem>>, %arg3: memref<32x256xf32, #tpu.memory_space<vmem>>) attributes {dimension_semantics = [#tpu.dimension_semantics<parallel>], iteration_bounds = array<i64: 2>, scalar_prefetch = 0 : i64, scratch_operands = 1 : i64, tpu.core_type = #tpu.core_type<tc>, window_params = [{transform_indices = @transform_0, window_bounds = array<i64: 32, 64>}, {transform_indices = @transform_1, window_bounds = array<i64: 32, 512>}]} {
    %c0 = arith.constant 0 : index
    %c0_0 = arith.constant 0 : index
    %0 = vector.load %arg1[%c0, %c0_0] : memref<32x64xf32, #tpu.memory_space<vmem>>, vector<32x64xf32>
    %cst = arith.constant 0.000000e+00 : f32
    %1 = vector.broadcast %cst : f32 to vector<32x64xf32>
    %2 = arith.maximumf %0, %1 : vector<32x64xf32>
    %cst_1 = arith.constant 0.000000e+00 : f32
    %3 = vector.broadcast %cst_1 : f32 to vector<32x64xf32>
    %4 = arith.subf %3, %2 : vector<32x64xf32>
    %5 = tpu.concatenate %2, %4 in 1 : vector<32x64xf32>, vector<32x64xf32> -> vector<32x128xf32>
    %6 = tpu.concatenate %5, %5 in 1 : vector<32x128xf32>, vector<32x128xf32> -> vector<32x256xf32>
    %c0_2 = arith.constant 0 : index
    %c0_3 = arith.constant 0 : index
    %7 = vector.load %arg3[%c0_2, %c0_3] : memref<32x256xf32, #tpu.memory_space<vmem>>, vector<32x256xf32>
    tpu.vector_store %arg3[%c0_2, %c0_3], %6 {strides = array<i32>} : memref<32x256xf32, #tpu.memory_space<vmem>>, vector<32x256xf32>,
    %c0_4 = arith.constant 0 : index
    %c127 = arith.constant 127 : index
    %8 = vector.load %arg3[%c0_4, %c127] : memref<32x256xf32, #tpu.memory_space<vmem>>, vector<32x128xf32>
    %9 = arith.mulf %5, %8 : vector<32x128xf32>
    %c0_5 = arith.constant 0 : index
    %c0_6 = arith.constant 0 : index
    %10 = vector.load %arg2[%c0_5, %c0_6] : memref<32x512xf32, #tpu.memory_space<vmem>>, vector<32x128xf32>
    tpu.vector_store %arg2[%c0_5, %c0_6], %9 {strides = array<i32>} : memref<32x512xf32, #tpu.memory_space<vmem>>, vector<32x128xf32>,
    %c0_7 = arith.constant 0 : index
    %c126 = arith.constant 126 : index
    %11 = vector.load %arg3[%c0_7, %c126] : memref<32x256xf32, #tpu.memory_space<vmem>>, vector<32x128xf32>
    %12 = arith.mulf %5, %11 : vector<32x128xf32>
    %c0_8 = arith.constant 0 : index
    %c128 = arith.constant 128 : index
    %13 = vector.load %arg2[%c0_8, %c128] : memref<32x512xf32, #tpu.memory_space<vmem>>, vector<32x128xf32>
    tpu.vector_store %arg2[%c0_8, %c128], %12 {strides = array<i32>} : memref<32x512xf32, #tpu.memory_space<vmem>>, vector<32x128xf32>,
    %c0_9 = arith.constant 0 : index
    %c125 = arith.constant 125 : index
    %14 = vector.load %arg3[%c0_9, %c125] : memref<32x256xf32, #tpu.memory_space<vmem>>, vector<32x128xf32>
    %15 = arith.mulf %5, %14 : vector<32x128xf32>
    %c0_10 = arith.constant 0 : index
    %c256 = arith.constant 256 : index
    %16 = vector.load %arg2[%c0_10, %c256] : memref<32x512xf32, #tpu.memory_space<vmem>>, vector<32x128xf32>
    tpu.vector_store %arg2[%c0_10, %c256], %15 {strides = array<i32>} : memref<32x512xf32, #tpu.memory_space<vmem>>, vector<32x128xf32>,
    %c0_11 = arith.constant 0 : index
    %c124 = arith.constant 124 : index
    %17 = vector.load %arg3[%c0_11, %c124] : memref<32x256xf32, #tpu.memory_space<vmem>>, vector<32x128xf32>
    %18 = arith.mulf %5, %17 : vector<32x128xf32>
    %c0_12 = arith.constant 0 : index
    %c384 = arith.constant 384 : index
    %19 = vector.load %arg2[%c0_12, %c384] : memref<32x512xf32, #tpu.memory_space<vmem>>, vector<32x128xf32>
    tpu.vector_store %arg2[%c0_12, %c384], %18 {strides = array<i32>} : memref<32x512xf32, #tpu.memory_space<vmem>>, vector<32x128xf32>,
    return
  }
  func.func @transform_0(%arg0: i32) -> (i32, i32) {
    %c0_i32 = arith.constant 0 : i32
    %c0_i32_0 = arith.constant 0 : i32
    return %arg0, %c0_i32 : i32, i32
  }
  func.func @transform_1(%arg0: i32) -> (i32, i32) {
    %c0_i32 = arith.constant 0 : i32
    %c0_i32_0 = arith.constant 0 : i32
    return %arg0, %c0_i32 : i32, i32
  }
}

</mosaic_0001>

<llo_original>
// kernel: tpu_custom_call.1
$region0: #{tpu_custom_call.1}
  #allocation0 [shape = 'u32[]', space=smem, size = 0x4, offset = 0x4, fixed_abs, tag = 'smem constant byte address 0x4 - core index']
  #allocation1 [shape = 'u32[72,128]{1,0:T(1,128)}', space=vmem, size = 0x9000, scoped, tag = 'internal scratch']
  #allocation2 [shape = 'f32[32,256]{1,0:T(8,128)}', space=vmem, size = 0x8000, scoped, tag = 'scratch operand']
  %s0 = inlined_call_operand.hbm [shape: f32[64,64], index: 0, kind: input, shape index: {}]
  %s1 = inlined_call_operand.hbm [shape: f32[64,512], index: 1, kind: output, shape index: {}]
  %s2 = sld [smem:[#allocation0]]
  $region41: #{tpu_custom_call.1} parent=0
    _
  %s4 = ssub.s32 1, %s2
  %s5 = scalar_select 0, %s4, %s2
  $region1: #{tpu_custom_call.1} parent=0
    #allocation3 [shape = 'u8[32768]{0}', space=vmem, size = 0x8000, scoped, tag = 'input window, operand 0']
    #allocation4 [shape = 's32[2]{0}', space=sflag, size = 0x8, scoped, tag = 'scoped memory for tpu_custom_call.1']
    #allocation5 [shape = 's32[2]{0}', space=sflag, size = 0x8, scoped, tag = 'scoped memory for tpu_custom_call.1']
    #allocation6 [shape = 'u8[131072]{0}', space=vmem, size = 0x20000, scoped, tag = 'output window, operand 0']
    %6 = vsyncpa [#allocation4], 0
    %s7 = scalar_lea.sflag [#allocation4], 1
    %8 = vsyncpa %s7, 0
    %9 = vsyncpa [#allocation5], 0
    %s10 = scalar_lea.sflag [#allocation5], 1
    %11 = vsyncpa %s10, 0
    loop: start=0, step=1, limit=4
    $region2: #{tpu_custom_call.1} parent=1 // loop_pre_header
      _
    $region3: #{tpu_custom_call.1} parent=1 // loop_header
      %s13 = sphi 0, %s17
      %p14 = scmp.ge.s32.totalorder %s13, 4
      %s23 = sphi 0, %s25
      %s26 = sphi 0, %s23
      %s27 = sphi 0, %s26
      %s43 = sphi 0, %s27
      %s49 = sphi 0, %s51
      %s52 = sphi 0, %s49
      %s53 = sphi 0, %s52
      %s69 = sphi 0, %s53
    $region4: #{tpu_custom_call.1} parent=1 // loop_header_branch
      %16 = sbr.rel (%p14) target = $region8
    $region5: #{tpu_custom_call.1} parent=1 // loop_body
      %s18 = ssub.s32 %s13, 1
      %s19 = ssub.s32 %s13, 2
      %s20 = sadd.s32 %s13, 1
      %s21 = ssub.s32 %s13, %s20
      %p22 = scmp.eq.s32.totalorder %s21, 0
      %s24 = sadd.s32 %s23, 1
      %s25 = scalar_select %p22, %s23, %s24
      %p28 = pneg %p22
      %p29 = scmp.eq.s32.totalorder %s13, 1
      %p30 = por %p28, %p29
      %p31 = scmp.ne.s32.totalorder %s23, %s26
      %p32 = scmp.eq.s32.totalorder %s13, 0
      %p33 = por %p31, %p32
      %p34 = scmp.ne.s32.totalorder %s23, %s26
      %p35 = scmp.eq.s32.totalorder %s18, 1
      %p36 = por %p34, %p35
      %p37 = scmp.ne.s32.totalorder %s26, %s27
      %p38 = scmp.eq.s32.totalorder %s18, 0
      %p39 = por %p37, %p38
      %p40 = scmp.ne.s32.totalorder %s26, %s27
      %p41 = scmp.eq.s32.totalorder %s19, 1
      %p42 = por %p40, %p41
      %p44 = scmp.ne.s32.totalorder %s27, %s43
      %p45 = scmp.eq.s32.totalorder %s19, 0
      %p46 = por %p44, %p45
      %s47 = ssub.s32 %s13, %s20
      %p48 = scmp.eq.s32.totalorder %s47, 0
      %s50 = sadd.s32 %s49, 1
      %s51 = scalar_select %p48, %s49, %s50
      %p54 = pneg %p48
      %p55 = scmp.eq.s32.totalorder %s13, 1
      %p56 = por %p54, %p55
      %p57 = scmp.ne.s32.totalorder %s49, %s52
      %p58 = scmp.eq.s32.totalorder %s13, 0
      %p59 = por %p57, %p58
      %p60 = scmp.ne.s32.totalorder %s49, %s52
      %p61 = scmp.eq.s32.totalorder %s18, 1
      %p62 = por %p60, %p61
      %p63 = scmp.ne.s32.totalorder %s52, %s53
      %p64 = scmp.eq.s32.totalorder %s18, 0
      %p65 = por %p63, %p64
      %p66 = scmp.ne.s32.totalorder %s52, %s53
      %p67 = scmp.eq.s32.totalorder %s19, 1
      %p68 = por %p66, %p67
      %p70 = scmp.ne.s32.totalorder %s53, %s69
      %p71 = scmp.eq.s32.totalorder %s19, 0
      %p72 = por %p70, %p71
      %p73 = scmp.le.s32.totalorder 1, %s13
      %p74 = scmp.lt.s32.totalorder %s13, 3
      %p75 = pnand %p73, %p74
      %p76 = pneg %p75
      // Predicated region
      $region9: #{tpu_custom_call.1} parent=5 // pred_check
        _
      $region10: #{tpu_custom_call.1} parent=5 // pred_check_branch
        %78 = sbr.rel (%p75) target = $region12
      $region11: #{tpu_custom_call.1} parent=5 // pred_region
        %s79 = ssub.s32 %s13, 1
      $region12: #{tpu_custom_call.1} parent=5 // pred_fallthru
        _
      %p80 = scmp.lt.s32.totalorder %s13, 2
      // Predicated region
      $region13: #{tpu_custom_call.1} parent=5 // pred_check
        %p81 = pneg %p80
      $region14: #{tpu_custom_call.1} parent=5 // pred_check_branch
        %83 = sbr.rel (%p81) target = $region16
      $region15: #{tpu_custom_call.1} parent=5 // pred_region
        // Predicated region
        $region17: #{tpu_custom_call.1} parent=15 // pred_check
          %p84 = pneg %p33
        $region18: #{tpu_custom_call.1} parent=15 // pred_check_branch
          %86 = sbr.rel (%p84) target = $region20
        $region19: #{tpu_custom_call.1} parent=15 // pred_region
          %s87 = sand.u32 %s23, 1
          %s88 = scalar_lea.sflag [#allocation4], %s87
          %s89 = sand.u32 %s23, 1
          %s90 = smul.addr %s89, 32
          %s91 = scalar_lea.vmem [#allocation3], %s90
          %s92 = smul.u32 4, %s13
          %94 = vsyncadd %s88, 0
          %s95 = smul.addr %s92, 8
          %s96 = scalar_lea.hbm %s0, %s95
          %s97 = sshll.u32 %s96, 4
          %s98 = int_to_ptr.hbm [resolvable:$true] %s97
          %s99 = sshll.u32 %s91, 4
          %s100 = int_to_ptr.vmem [resolvable:$true] %s99
          %105 = dma.hbm_to_vmem [thread:$0]  %s98, 512, %s100, %s88, 128, 128, 8
        $region20: #{tpu_custom_call.1} parent=15 // pred_fallthru
          _
      $region16: #{tpu_custom_call.1} parent=5 // pred_fallthru
        _
      %p106 = scmp.le.s32.totalorder 1, %s13
      %p107 = scmp.lt.s32.totalorder %s13, 3
      %p108 = pnand %p106, %p107
      %p109 = pneg %p108
      // Predicated region
      $region21: #{tpu_custom_call.1} parent=5 // pred_check
        _
      $region22: #{tpu_custom_call.1} parent=5 // pred_check_branch
        %111 = sbr.rel (%p108) target = $region24
      $region23: #{tpu_custom_call.1} parent=5 // pred_region
        %s112 = ssub.s32 %s13, 1
        %s113 = sand.u32 %s26, 1
        %s114 = scalar_lea.sflag [#allocation4], %s113
        %s115 = sand.u32 %s26, 1
        %s116 = smul.addr %s115, 32
        %s117 = scalar_lea.vmem [#allocation3], %s116
        // Predicated region
        $region25: #{tpu_custom_call.1} parent=23 // pred_check
          %p118 = pneg %p39
        $region26: #{tpu_custom_call.1} parent=23 // pred_check_branch
          %120 = sbr.rel (%p118) target = $region28
        $region27: #{tpu_custom_call.1} parent=23 // pred_region
          %122 = dma.done %s114, 512
        $region28: #{tpu_custom_call.1} parent=23 // pred_fallthru
          _
        %s123 = sand.u32 %s26, 1
        %s124 = scalar_lea.sflag [#allocation4], %s123
        %s125 = sand.u32 %s26, 1
        %s126 = smul.addr %s125, 32
        %s127 = scalar_lea.vmem [#allocation3], %s126
        %p128 = pneg %p39
        %p129 = pneg %p36
        %p130 = pneg %p65
        %p131 = pneg %p62
        %s132 = sand.u32 %s52, 1
        %s133 = scalar_lea.sflag [#allocation5], %s132
        %s134 = sand.u32 %s52, 1
        %s135 = smul.addr %s134, 128
        %s136 = scalar_lea.vmem [#allocation6], %s135
        %s137 = smul.u32 4, %s18
        %s138 = smul.u32 4, %s18
        %v139 = vld [vmem:[%s117] sm:$0xff]
        %v140 = vld [vmem:[%s117 + $0x8] sm:$0xff]
        %v141 = vld [vmem:[%s117 + $0x10] sm:$0xff]
        %v142 = vld [vmem:[%s117 + $0x18] sm:$0xff]
        %v143 = vmax.f32 %v139, 0.0
        %v144 = vmax.f32 %v140, 0.0
        %v145 = vmax.f32 %v141, 0.0
        %v146 = vmax.f32 %v142, 0.0
        %v147 = vsub.f32 0.0, %v143
        %v148 = vsub.f32 0.0, %v144
        %v149 = vsub.f32 0.0, %v145
        %v150 = vsub.f32 0.0, %v146
        %155 = vrot.lane.b32.xlu0 %v147, 64
        %v156 = vpop.permute.xlu0 %155
        %157 = vrot.lane.b32.xlu0 %v148, 64
        %v158 = vpop.permute.xlu0 %157
        %159 = vrot.lane.b32.xlu0 %v149, 64
        %v160 = vpop.permute.xlu0 %159
        %161 = vrot.lane.b32.xlu0 %v150, 64
        %v162 = vpop.permute.xlu0 %161
        %vm167 = vcmask 523264
        %v168 = vsel %vm167, %v143, %v156
        %v169 = vsel %vm167, %v144, %v158
        %v170 = vsel %vm167, %v145, %v160
        %v171 = vsel %vm167, %v146, %v162
        %172 = vst [vmem:[#allocation2] sm:$0xff] %v168
        %173 = vst [vmem:[#allocation2 + $0x8] sm:$0xff] %v168
        %174 = vst [vmem:[#allocation2 + $0x10] sm:$0xff] %v169
        %175 = vst [vmem:[#allocation2 + $0x18] sm:$0xff] %v169
        %176 = vst [vmem:[#allocation2 + $0x20] sm:$0xff] %v170
        %177 = vst [vmem:[#allocation2 + $0x28] sm:$0xff] %v170
        %178 = vst [vmem:[#allocation2 + $0x30] sm:$0xff] %v171
        %179 = vst [vmem:[#allocation2 + $0x38] sm:$0xff] %v171
        %v180 = vld [vmem:[#allocation2] sm:$0xff]
        %v181 = vld [vmem:[#allocation2 + $0x8] sm:$0xff]
        %v182 = vld [vmem:[#allocation2 + $0x10] sm:$0xff]
        %v183 = vld [vmem:[#allocation2 + $0x18] sm:$0xff]
        %v184 = vld [vmem:[#allocation2 + $0x20] sm:$0xff]
        %v185 = vld [vmem:[#allocation2 + $0x28] sm:$0xff]
        %v186 = vld [vmem:[#allocation2 + $0x30] sm:$0xff]
        %v187 = vld [vmem:[#allocation2 + $0x38] sm:$0xff]
        %196 = vrot.lane.b32.xlu0 %v180, 1
        %v197 = vpop.permute.xlu0 %196
        %198 = vrot.lane.b32.xlu0 %v181, 1
        %v199 = vpop.permute.xlu0 %198
        %200 = vrot.lane.b32.xlu0 %v182, 1
        %v201 = vpop.permute.xlu0 %200
        %202 = vrot.lane.b32.xlu0 %v183, 1
        %v203 = vpop.permute.xlu0 %202
        %204 = vrot.lane.b32.xlu0 %v184, 1
        %v205 = vpop.permute.xlu0 %204
        %206 = vrot.lane.b32.xlu0 %v185, 1
        %v207 = vpop.permute.xlu0 %206
        %208 = vrot.lane.b32.xlu0 %v186, 1
        %v209 = vpop.permute.xlu0 %208
        %210 = vrot.lane.b32.xlu0 %v187, 1
        %v211 = vpop.permute.xlu0 %210
        %vm212 = vcmask 7168
        %v213 = vsel %vm212, %v197, %v199
        %v214 = vsel %vm212, %v201, %v203
        %v215 = vsel %vm212, %v205, %v207
        %v216 = vsel %vm212, %v209, %v211
        %v221 = vmul.f32 %v168, %v213
        %v222 = vmul.f32 %v169, %v214
        %v223 = vmul.f32 %v170, %v215
        %v224 = vmul.f32 %v171, %v216
        %225 = vst [vmem:[%s136] sm:$0xff] %v221
        %226 = vst [vmem:[%s136 + $0x20] sm:$0xff] %v222
        %227 = vst [vmem:[%s136 + $0x40] sm:$0xff] %v223
        %228 = vst [vmem:[%s136 + $0x60] sm:$0xff] %v224
        %v229 = vld [vmem:[#allocation2] sm:$0xff]
        %v230 = vld [vmem:[#allocation2 + $0x8] sm:$0xff]
        %v231 = vld [vmem:[#allocation2 + $0x10] sm:$0xff]
        %v232 = vld [vmem:[#allocation2 + $0x18] sm:$0xff]
        %v233 = vld [vmem:[#allocation2 + $0x20] sm:$0xff]
        %v234 = vld [vmem:[#allocation2 + $0x28] sm:$0xff]
        %v235 = vld [vmem:[#allocation2 + $0x30] sm:$0xff]
        %v236 = vld [vmem:[#allocation2 + $0x38] sm:$0xff]
        %245 = vrot.lane.b32.xlu0 %v229, 2
        %v246 = vpop.permute.xlu0 %245
        %247 = vrot.lane.b32.xlu0 %v230, 2
        %v248 = vpop.permute.xlu0 %247
        %249 = vrot.lane.b32.xlu0 %v231, 2
        %v250 = vpop.permute.xlu0 %249
        %251 = vrot.lane.b32.xlu0 %v232, 2
        %v252 = vpop.permute.xlu0 %251
        %253 = vrot.lane.b32.xlu0 %v233, 2
        %v254 = vpop.permute.xlu0 %253
        %255 = vrot.lane.b32.xlu0 %v234, 2
        %v256 = vpop.permute.xlu0 %255
        %257 = vrot.lane.b32.xlu0 %v235, 2
        %v258 = vpop.permute.xlu0 %257
        %259 = vrot.lane.b32.xlu0 %v236, 2
        %v260 = vpop.permute.xlu0 %259
        %vm261 = vcmask 15360
        %v262 = vsel %vm261, %v246, %v248
        %v263 = vsel %vm261, %v250, %v252
        %v264 = vsel %vm261, %v254, %v256
        %v265 = vsel %vm261, %v258, %v260
        %v270 = vmul.f32 %v168, %v262
        %v271 = vmul.f32 %v169, %v263
        %v272 = vmul.f32 %v170, %v264
        %v273 = vmul.f32 %v171, %v265
        %274 = vst [vmem:[%s136 + $0x8] sm:$0xff] %v270
        %275 = vst [vmem:[%s136 + $0x28] sm:$0xff] %v271
        %276 = vst [vmem:[%s136 + $0x48] sm:$0xff] %v272
        %277 = vst [vmem:[%s136 + $0x68] sm:$0xff] %v273
        %v278 = vld [vmem:[#allocation2] sm:$0xff]
        %v279 = vld [vmem:[#allocation2 + $0x8] sm:$0xff]
        %v280 = vld [vmem:[#allocation2 + $0x10] sm:$0xff]
        %v281 = vld [vmem:[#allocation2 + $0x18] sm:$0xff]
        %v282 = vld [vmem:[#allocation2 + $0x20] sm:$0xff]
        %v283 = vld [vmem:[#allocation2 + $0x28] sm:$0xff]
        %v284 = vld [vmem:[#allocation2 + $0x30] sm:$0xff]
        %v285 = vld [vmem:[#allocation2 + $0x38] sm:$0xff]
        %294 = vrot.lane.b32.xlu0 %v278, 3
        %v295 = vpop.permute.xlu0 %294
        %296 = vrot.lane.b32.xlu0 %v279, 3
        %v297 = vpop.permute.xlu0 %296
        %298 = vrot.lane.b32.xlu0 %v280, 3
        %v299 = vpop.permute.xlu0 %298
        %300 = vrot.lane.b32.xlu0 %v281, 3
        %v301 = vpop.permute.xlu0 %300
        %302 = vrot.lane.b32.xlu0 %v282, 3
        %v303 = vpop.permute.xlu0 %302
        %304 = vrot.lane.b32.xlu0 %v283, 3
        %v305 = vpop.permute.xlu0 %304
        %306 = vrot.lane.b32.xlu0 %v284, 3
        %v307 = vpop.permute.xlu0 %306
        %308 = vrot.lane.b32.xlu0 %v285, 3
        %v309 = vpop.permute.xlu0 %308
        %vm310 = vcmask 23552
        %v311 = vsel %vm310, %v295, %v297
        %v312 = vsel %vm310, %v299, %v301
        %v313 = vsel %vm310, %v303, %v305
        %v314 = vsel %vm310, %v307, %v309
        %v319 = vmul.f32 %v168, %v311
        %v320 = vmul.f32 %v169, %v312
        %v321 = vmul.f32 %v170, %v313
        %v322 = vmul.f32 %v171, %v314
        %323 = vst [vmem:[%s136 + $0x10] sm:$0xff] %v319
        %324 = vst [vmem:[%s136 + $0x30] sm:$0xff] %v320
        %325 = vst [vmem:[%s136 + $0x50] sm:$0xff] %v321
        %326 = vst [vmem:[%s136 + $0x70] sm:$0xff] %v322
        %v327 = vld [vmem:[#allocation2] sm:$0xff]
        %v328 = vld [vmem:[#allocation2 + $0x8] sm:$0xff]
        %v329 = vld [vmem:[#allocation2 + $0x10] sm:$0xff]
        %v330 = vld [vmem:[#allocation2 + $0x18] sm:$0xff]
        %v331 = vld [vmem:[#allocation2 + $0x20] sm:$0xff]
        %v332 = vld [vmem:[#allocation2 + $0x28] sm:$0xff]
        %v333 = vld [vmem:[#allocation2 + $0x30] sm:$0xff]
        %v334 = vld [vmem:[#allocation2 + $0x38] sm:$0xff]
        %343 = vrot.lane.b32.xlu0 %v327, 4
        %v344 = vpop.permute.xlu0 %343
        %345 = vrot.lane.b32.xlu0 %v328, 4
        %v346 = vpop.permute.xlu0 %345
        %347 = vrot.lane.b32.xlu0 %v329, 4
        %v348 = vpop.permute.xlu0 %347
        %349 = vrot.lane.b32.xlu0 %v330, 4
        %v350 = vpop.permute.xlu0 %349
        %351 = vrot.lane.b32.xlu0 %v331, 4
        %v352 = vpop.permute.xlu0 %351
        %353 = vrot.lane.b32.xlu0 %v332, 4
        %v354 = vpop.permute.xlu0 %353
        %355 = vrot.lane.b32.xlu0 %v333, 4
        %v356 = vpop.permute.xlu0 %355
        %357 = vrot.lane.b32.xlu0 %v334, 4
        %v358 = vpop.permute.xlu0 %357
        %vm359 = vcmask 31744
        %v360 = vsel %vm359, %v344, %v346
        %v361 = vsel %vm359, %v348, %v350
        %v362 = vsel %vm359, %v352, %v354
        %v363 = vsel %vm359, %v356, %v358
        %v368 = vmul.f32 %v168, %v360
        %v369 = vmul.f32 %v169, %v361
        %v370 = vmul.f32 %v170, %v362
        %v371 = vmul.f32 %v171, %v363
        %372 = vst [vmem:[%s136 + $0x18] sm:$0xff] %v368
        %373 = vst [vmem:[%s136 + $0x38] sm:$0xff] %v369
        %374 = vst [vmem:[%s136 + $0x58] sm:$0xff] %v370
        %375 = vst [vmem:[%s136 + $0x78] sm:$0xff] %v371
        %s376 = sand.u32 %s52, 1
        %s377 = scalar_lea.sflag [#allocation5], %s376
        %s378 = sand.u32 %s52, 1
        %s379 = smul.addr %s378, 128
        %s380 = scalar_lea.vmem [#allocation6], %s379
        // Predicated region
        $region29: #{tpu_custom_call.1} parent=23 // pred_check
          %p381 = pneg %p62
        $region30: #{tpu_custom_call.1} parent=23 // pred_check_branch
          %383 = sbr.rel (%p381) target = $region32
        $region31: #{tpu_custom_call.1} parent=23 // pred_region
          %s384 = smul.u32 4, %s18
          %386 = vsyncadd %s377, 0
          %s387 = smul.addr %s384, 4
          %s388 = smul.addr %s387, 8
          %s389 = scalar_lea.hbm %s1, %s388
          %s390 = sshll.u32 %s380, 4
          %s391 = int_to_ptr.vmem [resolvable:$true] %s390
          %s392 = sshll.u32 %s389, 4
          %s393 = int_to_ptr.hbm [resolvable:$true] %s392
          %398 = dma.vmem_to_hbm [thread:$0]  %s391, 2048, %s393, %s377, 512, 512, 32
        $region32: #{tpu_custom_call.1} parent=23 // pred_fallthru
          _
      $region24: #{tpu_custom_call.1} parent=5 // pred_fallthru
        _
      %p399 = scmp.le.s32.totalorder 2, %s13
      // Predicated region
      $region33: #{tpu_custom_call.1} parent=5 // pred_check
        %p400 = pneg %p399
      $region34: #{tpu_custom_call.1} parent=5 // pred_check_branch
        %402 = sbr.rel (%p400) target = $region36
      $region35: #{tpu_custom_call.1} parent=5 // pred_region
        %s403 = ssub.s32 %s13, 2
        // Predicated region
        $region37: #{tpu_custom_call.1} parent=35 // pred_check
          %p404 = pneg %p68
        $region38: #{tpu_custom_call.1} parent=35 // pred_check_branch
          %406 = sbr.rel (%p404) target = $region40
        $region39: #{tpu_custom_call.1} parent=35 // pred_region
          %s407 = sand.u32 %s53, 1
          %s408 = scalar_lea.sflag [#allocation5], %s407
          %s409 = sand.u32 %s53, 1
          %s410 = smul.addr %s409, 128
          %s411 = scalar_lea.vmem [#allocation6], %s410
          %413 = dma.done %s408, 2048
        $region40: #{tpu_custom_call.1} parent=35 // pred_fallthru
          _
      $region36: #{tpu_custom_call.1} parent=5 // pred_fallthru
        _
    $region6: #{tpu_custom_call.1} parent=1 // loop_footer
      %s17 = sadd.s32 1, %s13
    $region7: #{tpu_custom_call.1} parent=1 // loop_footer_branch
      %12 = sbr.rel target = $region3
    $region8: #{tpu_custom_call.1} parent=1 // loop_exit
      _
    %414 = vsyncpa [#allocation4], 1
    %s415 = scalar_lea.sflag [#allocation4], 1
    %416 = vsyncpa %s415, 1
    %417 = vsyncpa [#allocation5], 1
    %s418 = scalar_lea.sflag [#allocation5], 1
    %419 = vsyncpa %s418, 1

</llo_original>
